<compile_context>
chip_gen: v7x
topology: tpu7x:2x2x1
jax: 0.10.0
libtpu: 0.0.40
codegen_flags: <defaults>
</compile_context>

<pallas_src>
import math
import functools

import jax
import jax.numpy as jnp
from jax.experimental import pallas as pl
from jax.experimental.pallas import tpu as pltpu


def _attention_head_kernel(k_in_ref, q_in_ref, v_in_ref, *refs,
                           inv_sqrt_kdim, has_mask):
    if has_mask:
        bias_ref, wk_ref, wq_ref, wv_ref, bk_ref, bq_ref, bv_ref, o_ref = refs
    else:
        bias_ref = None
        wk_ref, wq_ref, wv_ref, bk_ref, bq_ref, bv_ref, o_ref = refs

    # Per-batch tiles (block leading dim squeezed by indexing).
    x_k = k_in_ref[0]          # (S, D) bf16
    x_q = q_in_ref[0]          # (S, D) bf16
    x_v = v_in_ref[0]          # (S, D) bf16

    # Linear projections: bf16 operands on the MXU, f32 accumulation, f32 biases.
    k = jnp.dot(x_k, wk_ref[...], preferred_element_type=jnp.float32) + bk_ref[...]  # (S, K)
    q = jnp.dot(x_q, wq_ref[...], preferred_element_type=jnp.float32) + bq_ref[...]  # (S, K)
    v = jnp.dot(x_v, wv_ref[...], preferred_element_type=jnp.float32) + bv_ref[...]  # (S, V)

    # Fold the 1/sqrt(kdim) scale into q instead of scaling the (S, S) scores.
    q = q * inv_sqrt_kdim

    # Attention scores: (S, S), bf16 MXU operands, f32 accumulate.
    scores = jnp.einsum('sk,tk->st',
                        q.astype(jnp.bfloat16), k.astype(jnp.bfloat16),
                        preferred_element_type=jnp.float32)
    if has_mask:
        # Additive bias: 0 where visible, -1e30 where masked (finite -> no NaN).
        scores = scores + bias_ref[0]

    # Softmax over the last axis, in f32.
    m = jnp.max(scores, axis=-1, keepdims=True)
    p = jnp.exp(scores - m)
    denom = jnp.sum(p, axis=-1, keepdims=True)
    alpha = p * pl.reciprocal(denom, approx=True)      # EUP, not a VALU divide

    # Weighted values: (S, V).
    out = jnp.dot(alpha.astype(jnp.bfloat16), v.astype(jnp.bfloat16),
                  preferred_element_type=jnp.float32)
    o_ref[0] = out.astype(o_ref.dtype)


def init_params(rng, kdim=32, vdim=32, d_model=128):
    """Deterministic synthetic parameters; weights stored transposed vs torch (x @ W)."""
    keys = jax.random.split(rng, 6)
    scale = 0.05
    wk = scale * jax.random.normal(keys[0], (d_model, kdim), jnp.float32)
    wq = scale * jax.random.normal(keys[1], (d_model, kdim), jnp.float32)
    wv = scale * jax.random.normal(keys[2], (d_model, vdim), jnp.float32)
    bk = scale * jax.random.normal(keys[3], (1, kdim), jnp.float32)
    bq = scale * jax.random.normal(keys[4], (1, kdim), jnp.float32)
    bv = scale * jax.random.normal(keys[5], (1, vdim), jnp.float32)
    return dict(wk=wk, wq=wq, wv=wv, bk=bk, bq=bq, bv=bv,
                kdim=kdim, vdim=vdim, d_model=d_model)


def attention_head(key_x, query_x, value_x, params, mask=None):
    """key/query/value: (S, B, d_model) float32, PyTorch layout. Returns (S, B, vdim)."""
    S, B, D = key_x.shape
    K, V = params['kdim'], params['vdim']
    assert D == params['d_model']

    # Glue: batch-major for the kernel; bf16 operands halve the input DMA bytes.
    kb = jnp.transpose(key_x, (1, 0, 2)).astype(jnp.bfloat16)
    qb = jnp.transpose(query_x, (1, 0, 2)).astype(jnp.bfloat16)
    vb = jnp.transpose(value_x, (1, 0, 2)).astype(jnp.bfloat16)

    wk = params['wk'].astype(jnp.bfloat16)
    wq = params['wq'].astype(jnp.bfloat16)
    wv = params['wv'].astype(jnp.bfloat16)

    has_mask = mask is not None
    kernel = functools.partial(_attention_head_kernel,
                               inv_sqrt_kdim=1.0 / math.sqrt(K),
                               has_mask=has_mask)

    in_specs = [
        pl.BlockSpec((1, S, D), lambda b: (b, 0, 0)),   # key
        pl.BlockSpec((1, S, D), lambda b: (b, 0, 0)),   # query
        pl.BlockSpec((1, S, D), lambda b: (b, 0, 0)),   # value
    ]
    inputs = [kb, qb, vb]
    if has_mask:
        bias = jnp.where(jnp.broadcast_to(mask, (B, S, S)) == 0,
                         jnp.float32(-1e30), jnp.float32(0.0))
        in_specs.append(pl.BlockSpec((1, S, S), lambda b: (b, 0, 0)))   # additive bias
        inputs.append(bias)
    in_specs += [
        pl.BlockSpec((D, K), lambda b: (0, 0)),   # wk
        pl.BlockSpec((D, K), lambda b: (0, 0)),   # wq
        pl.BlockSpec((D, V), lambda b: (0, 0)),   # wv
        pl.BlockSpec((1, K), lambda b: (0, 0)),   # bk
        pl.BlockSpec((1, K), lambda b: (0, 0)),   # bq
        pl.BlockSpec((1, V), lambda b: (0, 0)),   # bv
    ]
    inputs += [wk, wq, wv, params['bk'], params['bq'], params['bv']]

    out_bsd = pl.pallas_call(
        kernel,
        out_shape=jax.ShapeDtypeStruct((B, S, V), jnp.float32),
        grid_spec=pltpu.PrefetchScalarGridSpec(
            num_scalar_prefetch=0,
            grid=(B,),
            in_specs=in_specs,
            out_specs=pl.BlockSpec((1, S, V), lambda b: (b, 0, 0)),
        ),
        compiler_params=pltpu.CompilerParams(
            dimension_semantics=("parallel",)),
    )(*inputs)

    # Back to PyTorch layout (S, B, vdim).
    return jnp.transpose(out_bsd, (1, 0, 2))


def reference(key_x, query_x, value_x, params, mask=None):
    """Pure-JAX (f32) reproduction of the PyTorch forward for verification."""
    K = params['kdim']
    k = key_x @ params['wk'] + params['bk'][0]
    q = query_x @ params['wq'] + params['bq'][0]
    v = value_x @ params['wv'] + params['bv'][0]
    qb = jnp.transpose(q, (1, 0, 2))     # (B, S, K)
    kb = jnp.transpose(k, (1, 0, 2))
    vb = jnp.transpose(v, (1, 0, 2))
    prod = jnp.einsum('bsk,btk->bst', qb, kb)
    if mask is not None:
        prod = jnp.where(mask == 0, -jnp.inf, prod)
    prod = prod / math.sqrt(K)
    alpha = jax.nn.softmax(prod, axis=-1)
    out = jnp.einsum('bst,btv->bsv', alpha, vb)
    return jnp.transpose(out, (1, 0, 2))  # (S, B, V)


if __name__ == "__main__":
    d_model, kdim, vdim = 128, 32, 32
    S, B = 8, 2

    rng = jax.random.PRNGKey(0)
    r_p, r_k, r_q, r_v = jax.random.split(rng, 4)
    params = init_params(r_p, kdim=kdim, vdim=vdim, d_model=d_model)

    key_x = jax.random.normal(r_k, (S, B, d_model), jnp.float32)
    query_x = jax.random.normal(r_q, (S, B, d_model), jnp.float32)
    value_x = jax.random.normal(r_v, (S, B, d_model), jnp.float32)

    # Path 1: mask=None (statically skips mask DMA and compare/select).
    out = jax.block_until_ready(attention_head(key_x, query_x, value_x, params, mask=None))
    ref = reference(key_x, query_x, value_x, params, mask=None)
    assert out.shape == (S, B, vdim)
    assert jnp.allclose(out, ref, atol=2e-2, rtol=2e-2), "mismatch vs reference (no mask)"

    # Path 2: causal mask.
    mask = jnp.tril(jnp.ones((S, S), jnp.float32))
    out_m = jax.block_until_ready(attention_head(key_x, query_x, value_x, params, mask=mask))
    ref_m = reference(key_x, query_x, value_x, params, mask=mask)
    assert jnp.allclose(out_m, ref_m, atol=2e-2, rtol=2e-2), "mismatch vs reference (mask)"

    print("KERNEL_OK")
</pallas_src>

<mosaic_0001>
module attributes {stable_mosaic.version = 11 : i64} {
  func.func @_attention_head_kernel(%arg0: i32, %arg1: memref<1x8x128xbf16, #tpu.memory_space<vmem>>, %arg2: memref<1x8x128xbf16, #tpu.memory_space<vmem>>, %arg3: memref<1x8x128xbf16, #tpu.memory_space<vmem>>, %arg4: memref<128x32xbf16, #tpu.memory_space<vmem>>, %arg5: memref<128x32xbf16, #tpu.memory_space<vmem>>, %arg6: memref<128x32xbf16, #tpu.memory_space<vmem>>, %arg7: memref<1x32xf32, #tpu.memory_space<vmem>>, %arg8: memref<1x32xf32, #tpu.memory_space<vmem>>, %arg9: memref<1x32xf32, #tpu.memory_space<vmem>>, %arg10: memref<1x8x32xf32, #tpu.memory_space<vmem>>) attributes {dimension_semantics = [#tpu.dimension_semantics<parallel>], iteration_bounds = array<i64: 2>, scalar_prefetch = 0 : i64, scratch_operands = 0 : i64, tpu.core_type = #tpu.core_type<tc>, window_params = [{transform_indices = @transform_0, window_bounds = array<i64: 1, 8, 128>}, {transform_indices = @transform_1, window_bounds = array<i64: 1, 8, 128>}, {transform_indices = @transform_2, window_bounds = array<i64: 1, 8, 128>}, {pipeline_mode = #tpu.pipeline_mode<synchronous>, transform_indices = @transform_3, window_bounds = array<i64: 128, 32>}, {pipeline_mode = #tpu.pipeline_mode<synchronous>, transform_indices = @transform_4, window_bounds = array<i64: 128, 32>}, {pipeline_mode = #tpu.pipeline_mode<synchronous>, transform_indices = @transform_5, window_bounds = array<i64: 128, 32>}, {pipeline_mode = #tpu.pipeline_mode<synchronous>, transform_indices = @transform_6, window_bounds = array<i64: 1, 32>}, {pipeline_mode = #tpu.pipeline_mode<synchronous>, transform_indices = @transform_7, window_bounds = array<i64: 1, 32>}, {pipeline_mode = #tpu.pipeline_mode<synchronous>, transform_indices = @transform_8, window_bounds = array<i64: 1, 32>}, {transform_indices = @transform_9, window_bounds = array<i64: 1, 8, 32>}]} {
    %c0 = arith.constant 0 : index
    %c0_0 = arith.constant 0 : index
    %c0_1 = arith.constant 0 : index
    %0 = vector.load %arg1[%c0, %c0_0, %c0_1] : memref<1x8x128xbf16, #tpu.memory_space<vmem>>, vector<1x8x128xbf16>
    %1 = vector.shape_cast %0 : vector<1x8x128xbf16> to vector<8x128xbf16>
    %c0_2 = arith.constant 0 : index
    %c0_3 = arith.constant 0 : index
    %c0_4 = arith.constant 0 : index
    %2 = vector.load %arg2[%c0_2, %c0_3, %c0_4] : memref<1x8x128xbf16, #tpu.memory_space<vmem>>, vector<1x8x128xbf16>
    %3 = vector.shape_cast %2 : vector<1x8x128xbf16> to vector<8x128xbf16>
    %c0_5 = arith.constant 0 : index
    %c0_6 = arith.constant 0 : index
    %c0_7 = arith.constant 0 : index
    %4 = vector.load %arg3[%c0_5, %c0_6, %c0_7] : memref<1x8x128xbf16, #tpu.memory_space<vmem>>, vector<1x8x128xbf16>
    %5 = vector.shape_cast %4 : vector<1x8x128xbf16> to vector<8x128xbf16>
    %c0_8 = arith.constant 0 : index
    %c0_9 = arith.constant 0 : index
    %6 = vector.load %arg4[%c0_8, %c0_9] : memref<128x32xbf16, #tpu.memory_space<vmem>>, vector<128x32xbf16>
    %cst = arith.constant dense<0.000000e+00> : vector<8x32xf32>
    %7 = tpu.matmul %1, %6, %cst {dimension_numbers = #tpu.dot_dimension_numbers<[1], [0], [0], [1], [0, 0, 1, 1], [], []>} : vector<8x128xbf16>, vector<128x32xbf16>, vector<8x32xf32> -> vector<8x32xf32>
    %c0_10 = arith.constant 0 : index
    %c0_11 = arith.constant 0 : index
    %8 = vector.load %arg7[%c0_10, %c0_11] : memref<1x32xf32, #tpu.memory_space<vmem>>, vector<1x32xf32>
    %9 = vector.broadcast %8 : vector<1x32xf32> to vector<8x32xf32>
    %10 = arith.addf %7, %9 : vector<8x32xf32>
    %c0_12 = arith.constant 0 : index
    %c0_13 = arith.constant 0 : index
    %11 = vector.load %arg5[%c0_12, %c0_13] : memref<128x32xbf16, #tpu.memory_space<vmem>>, vector<128x32xbf16>
    %cst_14 = arith.constant dense<0.000000e+00> : vector<8x32xf32>
    %12 = tpu.matmul %3, %11, %cst_14 {dimension_numbers = #tpu.dot_dimension_numbers<[1], [0], [0], [1], [0, 0, 1, 1], [], []>} : vector<8x128xbf16>, vector<128x32xbf16>, vector<8x32xf32> -> vector<8x32xf32>
    %c0_15 = arith.constant 0 : index
    %c0_16 = arith.constant 0 : index
    %13 = vector.load %arg8[%c0_15, %c0_16] : memref<1x32xf32, #tpu.memory_space<vmem>>, vector<1x32xf32>
    %14 = vector.broadcast %13 : vector<1x32xf32> to vector<8x32xf32>
    %15 = arith.addf %12, %14 : vector<8x32xf32>
    %c0_17 = arith.constant 0 : index
    %c0_18 = arith.constant 0 : index
    %16 = vector.load %arg6[%c0_17, %c0_18] : memref<128x32xbf16, #tpu.memory_space<vmem>>, vector<128x32xbf16>
    %cst_19 = arith.constant dense<0.000000e+00> : vector<8x32xf32>
    %17 = tpu.matmul %5, %16, %cst_19 {dimension_numbers = #tpu.dot_dimension_numbers<[1], [0], [0], [1], [0, 0, 1, 1], [], []>} : vector<8x128xbf16>, vector<128x32xbf16>, vector<8x32xf32> -> vector<8x32xf32>
    %c0_20 = arith.constant 0 : index
    %c0_21 = arith.constant 0 : index
    %18 = vector.load %arg9[%c0_20, %c0_21] : memref<1x32xf32, #tpu.memory_space<vmem>>, vector<1x32xf32>
    %19 = vector.broadcast %18 : vector<1x32xf32> to vector<8x32xf32>
    %20 = arith.addf %17, %19 : vector<8x32xf32>
    %cst_22 = arith.constant 0.176776692 : f32
    %21 = vector.broadcast %cst_22 : f32 to vector<8x32xf32>
    %22 = arith.mulf %15, %21 : vector<8x32xf32>
    %23 = arith.truncf %22 : vector<8x32xf32> to vector<8x32xbf16>
    %24 = arith.truncf %10 : vector<8x32xf32> to vector<8x32xbf16>
    "tpu.trace_start"() <{level = 10 : i32, message = "sk,tk->st"}> : () -> ()
    %cst_23 = arith.constant dense<0.000000e+00> : vector<8x8xf32>
    %25 = tpu.matmul %23, %24, %cst_23 {dimension_numbers = #tpu.dot_dimension_numbers<[1], [1], [0], [0], [0, 0, 1, 0], [], []>} : vector<8x32xbf16>, vector<8x32xbf16>, vector<8x8xf32> -> vector<8x8xf32>
    "tpu.trace_stop"() : () -> ()
    %cst_24 = arith.constant dense<0xFF800000> : vector<8xf32>
    %26 = vector.multi_reduction <maximumf>, %25, %cst_24 [1] : vector<8x8xf32> to vector<8xf32>
    %27 = vector.shape_cast %26 : vector<8xf32> to vector<8x1xf32>
    %28 = vector.broadcast %27 : vector<8x1xf32> to vector<8x8xf32>
    %29 = arith.subf %25, %28 : vector<8x8xf32>
    %30 = math.exp %29 : vector<8x8xf32>
    %cst_25 = arith.constant dense<0.000000e+00> : vector<8xf32>
    %31 = vector.multi_reduction <add>, %30, %cst_25 [1] : vector<8x8xf32> to vector<8xf32>
    %32 = vector.shape_cast %31 : vector<8xf32> to vector<8x1xf32>
    %33 = tpu.reciprocal %32 {approx = true} : vector<8x1xf32> -> vector<8x1xf32>
    %34 = vector.broadcast %33 : vector<8x1xf32> to vector<8x8xf32>
    %35 = arith.mulf %30, %34 : vector<8x8xf32>
    %36 = arith.truncf %35 : vector<8x8xf32> to vector<8x8xbf16>
    %37 = arith.truncf %20 : vector<8x32xf32> to vector<8x32xbf16>
    %cst_26 = arith.constant dense<0.000000e+00> : vector<8x32xf32>
    %38 = tpu.matmul %36, %37, %cst_26 {dimension_numbers = #tpu.dot_dimension_numbers<[1], [0], [0], [1], [0, 0, 1, 1], [], []>} : vector<8x8xbf16>, vector<8x32xbf16>, vector<8x32xf32> -> vector<8x32xf32>
    %c0_27 = arith.constant 0 : index
    %c0_28 = arith.constant 0 : index
    %c0_29 = arith.constant 0 : index
    %39 = vector.load %arg10[%c0_27, %c0_28, %c0_29] : memref<1x8x32xf32, #tpu.memory_space<vmem>>, vector<1x8x32xf32>
    %40 = vector.shape_cast %39 : vector<1x8x32xf32> to vector<8x32xf32>
    %41 = vector.shape_cast %38 : vector<8x32xf32> to vector<1x8x32xf32>
    tpu.vector_store %arg10[%c0_27, %c0_28, %c0_29], %41 {strides = array<i32>} : memref<1x8x32xf32, #tpu.memory_space<vmem>>, vector<1x8x32xf32>,
    return
  }
  func.func @transform_0(%arg0: i32) -> (i32, i32, i32) {
    %c0_i32 = arith.constant 0 : i32
    %c0_i32_0 = arith.constant 0 : i32
    %c0_i32_1 = arith.constant 0 : i32
    return %arg0, %c0_i32, %c0_i32_0 : i32, i32, i32
  }
  func.func @transform_1(%arg0: i32) -> (i32, i32, i32) {
    %c0_i32 = arith.constant 0 : i32
    %c0_i32_0 = arith.constant 0 : i32
    %c0_i32_1 = arith.constant 0 : i32
    return %arg0, %c0_i32, %c0_i32_0 : i32, i32, i32
  }
  func.func @transform_2(%arg0: i32) -> (i32, i32, i32) {
    %c0_i32 = arith.constant 0 : i32
    %c0_i32_0 = arith.constant 0 : i32
    %c0_i32_1 = arith.constant 0 : i32
    return %arg0, %c0_i32, %c0_i32_0 : i32, i32, i32
  }
  func.func @transform_3(%arg0: i32) -> (i32, i32) {
    %c0_i32 = arith.constant 0 : i32
    %c0_i32_0 = arith.constant 0 : i32
    %c0_i32_1 = arith.constant 0 : i32
    return %c0_i32, %c0_i32_0 : i32, i32
  }
  func.func @transform_4(%arg0: i32) -> (i32, i32) {
    %c0_i32 = arith.constant 0 : i32
    %c0_i32_0 = arith.constant 0 : i32
    %c0_i32_1 = arith.constant 0 : i32
    return %c0_i32, %c0_i32_0 : i32, i32
  }
  func.func @transform_5(%arg0: i32) -> (i32, i32) {
    %c0_i32 = arith.constant 0 : i32
    %c0_i32_0 = arith.constant 0 : i32
    %c0_i32_1 = arith.constant 0 : i32
    return %c0_i32, %c0_i32_0 : i32, i32
  }
  func.func @transform_6(%arg0: i32) -> (i32, i32) {
    %c0_i32 = arith.constant 0 : i32
    %c0_i32_0 = arith.constant 0 : i32
    %c0_i32_1 = arith.constant 0 : i32
    return %c0_i32, %c0_i32_0 : i32, i32
  }
  func.func @transform_7(%arg0: i32) -> (i32, i32) {
    %c0_i32 = arith.constant 0 : i32
    %c0_i32_0 = arith.constant 0 : i32
    %c0_i32_1 = arith.constant 0 : i32
    return %c0_i32, %c0_i32_0 : i32, i32
  }
  func.func @transform_8(%arg0: i32) -> (i32, i32) {
    %c0_i32 = arith.constant 0 : i32
    %c0_i32_0 = arith.constant 0 : i32
    %c0_i32_1 = arith.constant 0 : i32
    return %c0_i32, %c0_i32_0 : i32, i32
  }
  func.func @transform_9(%arg0: i32) -> (i32, i32, i32) {
    %c0_i32 = arith.constant 0 : i32
    %c0_i32_0 = arith.constant 0 : i32
    %c0_i32_1 = arith.constant 0 : i32
    return %arg0, %c0_i32, %c0_i32_0 : i32, i32, i32
  }
}

</mosaic_0001>

<llo_original>
// kernel: tpu_custom_call.1
$region0: #{tpu_custom_call.1}
  #allocation0 [shape = 'u32[]', space=smem, size = 0x4, offset = 0x4, fixed_abs, tag = 'smem constant byte address 0x4 - core index']
  #allocation1 [shape = 'u32[144,128]{1,0:T(1,128)}', space=vmem, size = 0x12000, scoped, tag = 'internal scratch']
  %s0 = inlined_call_operand.vmem [shape: bf16[2,8,128], index: 0, kind: input, shape index: {}]
  %s1 = inlined_call_operand.vmem [shape: bf16[2,8,128], index: 1, kind: input, shape index: {}]
  %s2 = inlined_call_operand.vmem [shape: bf16[2,8,128], index: 2, kind: input, shape index: {}]
  %s3 = inlined_call_operand.vmem [shape: bf16[128,32], index: 3, kind: input, shape index: {}]
  %s4 = inlined_call_operand.vmem [shape: bf16[128,32], index: 4, kind: input, shape index: {}]
  %s5 = inlined_call_operand.vmem [shape: bf16[128,32], index: 5, kind: input, shape index: {}]
  %s6 = inlined_call_operand.vmem [shape: f32[1,32], index: 6, kind: input, shape index: {}]
  %s7 = inlined_call_operand.vmem [shape: f32[1,32], index: 7, kind: input, shape index: {}]
  %s8 = inlined_call_operand.vmem [shape: f32[1,32], index: 8, kind: input, shape index: {}]
  %s9 = inlined_call_operand.hbm [shape: f32[2,8,32], index: 9, kind: output, shape index: {}]
  %s10 = sld [smem:[#allocation0]]
  $region69: #{tpu_custom_call.1} parent=0
    _
  %s12 = ssub.s32 1, %s10
  %s13 = scalar_select 0, %s12, %s10
  $region1: #{tpu_custom_call.1} parent=0
    #allocation2 [shape = 'u8[8192]{0}', space=vmem, size = 0x2000, scoped, tag = 'output window, operand 0']
    #allocation3 [shape = 's32[2]{0}', space=sflag, size = 0x8, scoped, tag = 'scoped memory for tpu_custom_call.1']
    %14 = vsyncpa [#allocation3], 0
    %s15 = scalar_lea.sflag [#allocation3], 1
    %16 = vsyncpa %s15, 0
    loop: start=0, step=1, limit=4
    $region2: #{tpu_custom_call.1} parent=1 // loop_pre_header
      _
    $region3: #{tpu_custom_call.1} parent=1 // loop_header
      %s18 = sphi 0, %s22
      %p19 = scmp.ge.s32.totalorder %s18, 4
      %s28 = sphi 0, %s30
      %s31 = sphi 0, %s28
      %s32 = sphi 0, %s31
      %s48 = sphi 0, %s32
      %s54 = sphi 0, %s56
      %s57 = sphi 0, %s54
      %s58 = sphi 0, %s57
      %s74 = sphi 0, %s58
      %s80 = sphi 0, %s82
      %s83 = sphi 0, %s80
      %s84 = sphi 0, %s83
      %s100 = sphi 0, %s84
      %s104 = sphi 0, %s104
      %s106 = sphi 0, %s104
      %s107 = sphi 0, %s106
      %s121 = sphi 0, %s107
      %s125 = sphi 0, %s125
      %s127 = sphi 0, %s125
      %s128 = sphi 0, %s127
      %s142 = sphi 0, %s128
      %s146 = sphi 0, %s146
      %s148 = sphi 0, %s146
      %s149 = sphi 0, %s148
      %s163 = sphi 0, %s149
      %s167 = sphi 0, %s167
      %s169 = sphi 0, %s167
      %s170 = sphi 0, %s169
      %s184 = sphi 0, %s170
      %s188 = sphi 0, %s188
      %s190 = sphi 0, %s188
      %s191 = sphi 0, %s190
      %s205 = sphi 0, %s191
      %s209 = sphi 0, %s209
      %s211 = sphi 0, %s209
      %s212 = sphi 0, %s211
      %s226 = sphi 0, %s212
      %s232 = sphi 0, %s234
      %s235 = sphi 0, %s232
      %s236 = sphi 0, %s235
      %s252 = sphi 0, %s236
    $region4: #{tpu_custom_call.1} parent=1 // loop_header_branch
      %21 = sbr.rel (%p19) target = $region8
    $region5: #{tpu_custom_call.1} parent=1 // loop_body
      %s23 = ssub.s32 %s18, 1
      %s24 = ssub.s32 %s18, 2
      %s25 = sadd.s32 %s18, 1
      %s26 = ssub.s32 %s18, %s25
      %p27 = scmp.eq.s32.totalorder %s26, 0
      %s29 = sadd.s32 %s28, 1
      %s30 = scalar_select %p27, %s28, %s29
      %p33 = pneg %p27
      %p34 = scmp.eq.s32.totalorder %s18, 1
      %p35 = por %p33, %p34
      %p36 = scmp.ne.s32.totalorder %s28, %s31
      %p37 = scmp.eq.s32.totalorder %s18, 0
      %p38 = por %p36, %p37
      %p39 = scmp.ne.s32.totalorder %s28, %s31
      %p40 = scmp.eq.s32.totalorder %s23, 1
      %p41 = por %p39, %p40
      %p42 = scmp.ne.s32.totalorder %s31, %s32
      %p43 = scmp.eq.s32.totalorder %s23, 0
      %p44 = por %p42, %p43
      %p45 = scmp.ne.s32.totalorder %s31, %s32
      %p46 = scmp.eq.s32.totalorder %s24, 1
      %p47 = por %p45, %p46
      %p49 = scmp.ne.s32.totalorder %s32, %s48
      %p50 = scmp.eq.s32.totalorder %s24, 0
      %p51 = por %p49, %p50
      %s52 = ssub.s32 %s18, %s25
      %p53 = scmp.eq.s32.totalorder %s52, 0
      %s55 = sadd.s32 %s54, 1
      %s56 = scalar_select %p53, %s54, %s55
      %p59 = pneg %p53
      %p60 = scmp.eq.s32.totalorder %s18, 1
      %p61 = por %p59, %p60
      %p62 = scmp.ne.s32.totalorder %s54, %s57
      %p63 = scmp.eq.s32.totalorder %s18, 0
      %p64 = por %p62, %p63
      %p65 = scmp.ne.s32.totalorder %s54, %s57
      %p66 = scmp.eq.s32.totalorder %s23, 1
      %p67 = por %p65, %p66
      %p68 = scmp.ne.s32.totalorder %s57, %s58
      %p69 = scmp.eq.s32.totalorder %s23, 0
      %p70 = por %p68, %p69
      %p71 = scmp.ne.s32.totalorder %s57, %s58
      %p72 = scmp.eq.s32.totalorder %s24, 1
      %p73 = por %p71, %p72
      %p75 = scmp.ne.s32.totalorder %s58, %s74
      %p76 = scmp.eq.s32.totalorder %s24, 0
      %p77 = por %p75, %p76
      %s78 = ssub.s32 %s18, %s25
      %p79 = scmp.eq.s32.totalorder %s78, 0
      %s81 = sadd.s32 %s80, 1
      %s82 = scalar_select %p79, %s80, %s81
      %p85 = pneg %p79
      %p86 = scmp.eq.s32.totalorder %s18, 1
      %p87 = por %p85, %p86
      %p88 = scmp.ne.s32.totalorder %s80, %s83
      %p89 = scmp.eq.s32.totalorder %s18, 0
      %p90 = por %p88, %p89
      %p91 = scmp.ne.s32.totalorder %s80, %s83
      %p92 = scmp.eq.s32.totalorder %s23, 1
      %p93 = por %p91, %p92
      %p94 = scmp.ne.s32.totalorder %s83, %s84
      %p95 = scmp.eq.s32.totalorder %s23, 0
      %p96 = por %p94, %p95
      %p97 = scmp.ne.s32.totalorder %s83, %s84
      %p98 = scmp.eq.s32.totalorder %s24, 1
      %p99 = por %p97, %p98
      %p101 = scmp.ne.s32.totalorder %s84, %s100
      %p102 = scmp.eq.s32.totalorder %s24, 0
      %p103 = por %p101, %p102
      %s105 = sadd.s32 %s104, 1
      %p108 = scmp.eq.s32.totalorder %s18, 1
      %p109 = scmp.ne.s32.totalorder %s104, %s106
      %p110 = scmp.eq.s32.totalorder %s18, 0
      %p111 = por %p109, %p110
      %p112 = scmp.ne.s32.totalorder %s104, %s106
      %p113 = scmp.eq.s32.totalorder %s23, 1
      %p114 = por %p112, %p113
      %p115 = scmp.ne.s32.totalorder %s106, %s107
      %p116 = scmp.eq.s32.totalorder %s23, 0
      %p117 = por %p115, %p116
      %p118 = scmp.ne.s32.totalorder %s106, %s107
      %p119 = scmp.eq.s32.totalorder %s24, 1
      %p120 = por %p118, %p119
      %p122 = scmp.ne.s32.totalorder %s107, %s121
      %p123 = scmp.eq.s32.totalorder %s24, 0
      %p124 = por %p122, %p123
      %s126 = sadd.s32 %s125, 1
      %p129 = scmp.eq.s32.totalorder %s18, 1
      %p130 = scmp.ne.s32.totalorder %s125, %s127
      %p131 = scmp.eq.s32.totalorder %s18, 0
      %p132 = por %p130, %p131
      %p133 = scmp.ne.s32.totalorder %s125, %s127
      %p134 = scmp.eq.s32.totalorder %s23, 1
      %p135 = por %p133, %p134
      %p136 = scmp.ne.s32.totalorder %s127, %s128
      %p137 = scmp.eq.s32.totalorder %s23, 0
      %p138 = por %p136, %p137
      %p139 = scmp.ne.s32.totalorder %s127, %s128
      %p140 = scmp.eq.s32.totalorder %s24, 1
      %p141 = por %p139, %p140
      %p143 = scmp.ne.s32.totalorder %s128, %s142
      %p144 = scmp.eq.s32.totalorder %s24, 0
      %p145 = por %p143, %p144
      %s147 = sadd.s32 %s146, 1
      %p150 = scmp.eq.s32.totalorder %s18, 1
      %p151 = scmp.ne.s32.totalorder %s146, %s148
      %p152 = scmp.eq.s32.totalorder %s18, 0
      %p153 = por %p151, %p152
      %p154 = scmp.ne.s32.totalorder %s146, %s148
      %p155 = scmp.eq.s32.totalorder %s23, 1
      %p156 = por %p154, %p155
      %p157 = scmp.ne.s32.totalorder %s148, %s149
      %p158 = scmp.eq.s32.totalorder %s23, 0
      %p159 = por %p157, %p158
      %p160 = scmp.ne.s32.totalorder %s148, %s149
      %p161 = scmp.eq.s32.totalorder %s24, 1
      %p162 = por %p160, %p161
      %p164 = scmp.ne.s32.totalorder %s149, %s163
      %p165 = scmp.eq.s32.totalorder %s24, 0
      %p166 = por %p164, %p165
      %s168 = sadd.s32 %s167, 1
      %p171 = scmp.eq.s32.totalorder %s18, 1
      %p172 = scmp.ne.s32.totalorder %s167, %s169
      %p173 = scmp.eq.s32.totalorder %s18, 0
      %p174 = por %p172, %p173
      %p175 = scmp.ne.s32.totalorder %s167, %s169
      %p176 = scmp.eq.s32.totalorder %s23, 1
      %p177 = por %p175, %p176
      %p178 = scmp.ne.s32.totalorder %s169, %s170
      %p179 = scmp.eq.s32.totalorder %s23, 0
      %p180 = por %p178, %p179
      %p181 = scmp.ne.s32.totalorder %s169, %s170
      %p182 = scmp.eq.s32.totalorder %s24, 1
      %p183 = por %p181, %p182
      %p185 = scmp.ne.s32.totalorder %s170, %s184
      %p186 = scmp.eq.s32.totalorder %s24, 0
      %p187 = por %p185, %p186
      %s189 = sadd.s32 %s188, 1
      %p192 = scmp.eq.s32.totalorder %s18, 1
      %p193 = scmp.ne.s32.totalorder %s188, %s190
      %p194 = scmp.eq.s32.totalorder %s18, 0
      %p195 = por %p193, %p194
      %p196 = scmp.ne.s32.totalorder %s188, %s190
      %p197 = scmp.eq.s32.totalorder %s23, 1
      %p198 = por %p196, %p197
      %p199 = scmp.ne.s32.totalorder %s190, %s191
      %p200 = scmp.eq.s32.totalorder %s23, 0
      %p201 = por %p199, %p200
      %p202 = scmp.ne.s32.totalorder %s190, %s191
      %p203 = scmp.eq.s32.totalorder %s24, 1
      %p204 = por %p202, %p203
      %p206 = scmp.ne.s32.totalorder %s191, %s205
      %p207 = scmp.eq.s32.totalorder %s24, 0
      %p208 = por %p206, %p207
      %s210 = sadd.s32 %s209, 1
      %p213 = scmp.eq.s32.totalorder %s18, 1
      %p214 = scmp.ne.s32.totalorder %s209, %s211
      %p215 = scmp.eq.s32.totalorder %s18, 0
      %p216 = por %p214, %p215
      %p217 = scmp.ne.s32.totalorder %s209, %s211
      %p218 = scmp.eq.s32.totalorder %s23, 1
      %p219 = por %p217, %p218
      %p220 = scmp.ne.s32.totalorder %s211, %s212
      %p221 = scmp.eq.s32.totalorder %s23, 0
      %p222 = por %p220, %p221
      %p223 = scmp.ne.s32.totalorder %s211, %s212
      %p224 = scmp.eq.s32.totalorder %s24, 1
      %p225 = por %p223, %p224
      %p227 = scmp.ne.s32.totalorder %s212, %s226
      %p228 = scmp.eq.s32.totalorder %s24, 0
      %p229 = por %p227, %p228
      %s230 = ssub.s32 %s18, %s25
      %p231 = scmp.eq.s32.totalorder %s230, 0
      %s233 = sadd.s32 %s232, 1
      %s234 = scalar_select %p231, %s232, %s233
      %p237 = pneg %p231
      %p238 = scmp.eq.s32.totalorder %s18, 1
      %p239 = por %p237, %p238
      %p240 = scmp.ne.s32.totalorder %s232, %s235
      %p241 = scmp.eq.s32.totalorder %s18, 0
      %p242 = por %p240, %p241
      %p243 = scmp.ne.s32.totalorder %s232, %s235
      %p244 = scmp.eq.s32.totalorder %s23, 1
      %p245 = por %p243, %p244
      %p246 = scmp.ne.s32.totalorder %s235, %s236
      %p247 = scmp.eq.s32.totalorder %s23, 0
      %p248 = por %p246, %p247
      %p249 = scmp.ne.s32.totalorder %s235, %s236
      %p250 = scmp.eq.s32.totalorder %s24, 1
      %p251 = por %p249, %p250
      %p253 = scmp.ne.s32.totalorder %s236, %s252
      %p254 = scmp.eq.s32.totalorder %s24, 0
      %p255 = por %p253, %p254
      %p256 = scmp.le.s32.totalorder 1, %s18
      %p257 = scmp.lt.s32.totalorder %s18, 3
      %p258 = pnand %p256, %p257
      %p259 = pneg %p258
      // Predicated region
      $region9: #{tpu_custom_call.1} parent=5 // pred_check
        _
      $region10: #{tpu_custom_call.1} parent=5 // pred_check_branch
        %261 = sbr.rel (%p258) target = $region12
      $region11: #{tpu_custom_call.1} parent=5 // pred_region
        %s262 = ssub.s32 %s18, 1
        // Predicated region
        $region13: #{tpu_custom_call.1} parent=11 // pred_check
          %p263 = pneg %p117
        $region14: #{tpu_custom_call.1} parent=11 // pred_check_branch
          %265 = sbr.rel (%p263) target = $region16
        $region15: #{tpu_custom_call.1} parent=11 // pred_region
          _
        $region16: #{tpu_custom_call.1} parent=11 // pred_fallthru
          _
        // Predicated region
        $region17: #{tpu_custom_call.1} parent=11 // pred_check
          %p266 = pneg %p138
        $region18: #{tpu_custom_call.1} parent=11 // pred_check_branch
          %268 = sbr.rel (%p266) target = $region20
        $region19: #{tpu_custom_call.1} parent=11 // pred_region
          _
        $region20: #{tpu_custom_call.1} parent=11 // pred_fallthru
          _
        // Predicated region
        $region21: #{tpu_custom_call.1} parent=11 // pred_check
          %p269 = pneg %p159
        $region22: #{tpu_custom_call.1} parent=11 // pred_check_branch
          %271 = sbr.rel (%p269) target = $region24
        $region23: #{tpu_custom_call.1} parent=11 // pred_region
          _
        $region24: #{tpu_custom_call.1} parent=11 // pred_fallthru
          _
        // Predicated region
        $region25: #{tpu_custom_call.1} parent=11 // pred_check
          %p272 = pneg %p180
        $region26: #{tpu_custom_call.1} parent=11 // pred_check_branch
          %274 = sbr.rel (%p272) target = $region28
        $region27: #{tpu_custom_call.1} parent=11 // pred_region
          _
        $region28: #{tpu_custom_call.1} parent=11 // pred_fallthru
          _
        // Predicated region
        $region29: #{tpu_custom_call.1} parent=11 // pred_check
          %p275 = pneg %p201
        $region30: #{tpu_custom_call.1} parent=11 // pred_check_branch
          %277 = sbr.rel (%p275) target = $region32
        $region31: #{tpu_custom_call.1} parent=11 // pred_region
          _
        $region32: #{tpu_custom_call.1} parent=11 // pred_fallthru
          _
        // Predicated region
        $region33: #{tpu_custom_call.1} parent=11 // pred_check
          %p278 = pneg %p222
        $region34: #{tpu_custom_call.1} parent=11 // pred_check_branch
          %280 = sbr.rel (%p278) target = $region36
        $region35: #{tpu_custom_call.1} parent=11 // pred_region
          _
        $region36: #{tpu_custom_call.1} parent=11 // pred_fallthru
          _
      $region12: #{tpu_custom_call.1} parent=5 // pred_fallthru
        _
      %p281 = scmp.lt.s32.totalorder %s18, 2
      // Predicated region
      $region37: #{tpu_custom_call.1} parent=5 // pred_check
        %p282 = pneg %p281
      $region38: #{tpu_custom_call.1} parent=5 // pred_check_branch
        %284 = sbr.rel (%p282) target = $region40
      $region39: #{tpu_custom_call.1} parent=5 // pred_region
        // Predicated region
        $region41: #{tpu_custom_call.1} parent=39 // pred_check
          %p285 = pneg %p38
        $region42: #{tpu_custom_call.1} parent=39 // pred_check_branch
          %287 = sbr.rel (%p285) target = $region44
        $region43: #{tpu_custom_call.1} parent=39 // pred_region
          %p288 = scmp.lt.s32.totalorder %s18, 1
          %s289 = scalar_select %p288, %s18, 1
          %s290 = smul.addr %s289, 4
          %s291 = scalar_lea.vmem %s0, %s290
        $region44: #{tpu_custom_call.1} parent=39 // pred_fallthru
          _
        // Predicated region
        $region45: #{tpu_custom_call.1} parent=39 // pred_check
          %p292 = pneg %p64
        $region46: #{tpu_custom_call.1} parent=39 // pred_check_branch
          %294 = sbr.rel (%p292) target = $region48
        $region47: #{tpu_custom_call.1} parent=39 // pred_region
          %p295 = scmp.lt.s32.totalorder %s18, 1
          %s296 = scalar_select %p295, %s18, 1
          %s297 = smul.addr %s296, 4
          %s298 = scalar_lea.vmem %s1, %s297
        $region48: #{tpu_custom_call.1} parent=39 // pred_fallthru
          _
        // Predicated region
        $region49: #{tpu_custom_call.1} parent=39 // pred_check
          %p299 = pneg %p90
        $region50: #{tpu_custom_call.1} parent=39 // pred_check_branch
          %301 = sbr.rel (%p299) target = $region52
        $region51: #{tpu_custom_call.1} parent=39 // pred_region
          %p302 = scmp.lt.s32.totalorder %s18, 1
          %s303 = scalar_select %p302, %s18, 1
          %s304 = smul.addr %s303, 4
          %s305 = scalar_lea.vmem %s2, %s304
        $region52: #{tpu_custom_call.1} parent=39 // pred_fallthru
          _
      $region40: #{tpu_custom_call.1} parent=5 // pred_fallthru
        _
      %p306 = scmp.le.s32.totalorder 1, %s18
      %p307 = scmp.lt.s32.totalorder %s18, 3
      %p308 = pnand %p306, %p307
      %p309 = pneg %p308
      // Predicated region
      $region53: #{tpu_custom_call.1} parent=5 // pred_check
        _
      $region54: #{tpu_custom_call.1} parent=5 // pred_check_branch
        %311 = sbr.rel (%p308) target = $region56
      $region55: #{tpu_custom_call.1} parent=5 // pred_region
        %s312 = ssub.s32 %s18, 1
        %p313 = scmp.lt.s32.totalorder %s23, 1
        %s314 = scalar_select %p313, %s23, 1
        %s315 = smul.addr %s314, 4
        %s316 = scalar_lea.vmem %s0, %s315
        %p317 = pneg %p44
        %p318 = pneg %p41
        %p319 = scmp.lt.s32.totalorder %s23, 1
        %s320 = scalar_select %p319, %s23, 1
        %s321 = smul.addr %s320, 4
        %s322 = scalar_lea.vmem %s1, %s321
        %p323 = pneg %p70
        %p324 = pneg %p67
        %p325 = scmp.lt.s32.totalorder %s23, 1
        %s326 = scalar_select %p325, %s23, 1
        %s327 = smul.addr %s326, 4
        %s328 = scalar_lea.vmem %s2, %s327
        %p329 = pneg %p96
        %p330 = pneg %p93
        %p331 = pneg %p117
        %p332 = pneg %p114
        %p333 = pneg %p138
        %p334 = pneg %p135
        %p335 = pneg %p159
        %p336 = pneg %p156
        %p337 = pneg %p180
        %p338 = pneg %p177
        %p339 = pneg %p201
        %p340 = pneg %p198
        %p341 = pneg %p222
        %p342 = pneg %p219
        %p343 = pneg %p248
        %p344 = pneg %p245
        %s345 = sand.u32 %s235, 1
        %s346 = scalar_lea.sflag [#allocation3], %s345
        %s347 = sand.u32 %s235, 1
        %s348 = smul.addr %s347, 8
        %s349 = scalar_lea.vmem [#allocation2], %s348
        %p350 = scmp.lt.s32.totalorder %s23, 1
        %s351 = scalar_select %p350, %s23, 1
        %s352 = smul.addr %s351, 4
        %s353 = scalar_lea.vmem %s0, %s352
        %p354 = scmp.lt.s32.totalorder %s23, 1
        %s355 = scalar_select %p354, %s23, 1
        %s356 = smul.addr %s355, 4
        %s357 = scalar_lea.vmem %s1, %s356
        %p358 = scmp.lt.s32.totalorder %s23, 1
        %s359 = scalar_select %p358, %s23, 1
        %s360 = smul.addr %s359, 4
        %s361 = scalar_lea.vmem %s2, %s360
        %v363 = vld [vmem:[%s353] sm:$0xf]
        %v364 = vld [vmem:[%s357] sm:$0xf]
        %v365 = vld [vmem:[%s361] sm:$0xf]
        %v366 = vld [vmem:[%s3] sm:$0xf]
        %v367 = vld [vmem:[%s3 + $0x4] sm:$0xf]
        %v368 = vld [vmem:[%s3 + $0x8] sm:$0xf]
        %v369 = vld [vmem:[%s3 + $0xc] sm:$0xf]
        %v370 = vld [vmem:[%s3 + $0x10] sm:$0xf]
        %v371 = vld [vmem:[%s3 + $0x14] sm:$0xf]
        %v372 = vld [vmem:[%s3 + $0x18] sm:$0xf]
        %v373 = vld [vmem:[%s3 + $0x1c] sm:$0xf]
        %v374 = vld [vmem:[%s3 + $0x20] sm:$0xf]
        %v375 = vld [vmem:[%s3 + $0x24] sm:$0xf]
        %v376 = vld [vmem:[%s3 + $0x28] sm:$0xf]
        %v377 = vld [vmem:[%s3 + $0x2c] sm:$0xf]
        %v378 = vld [vmem:[%s3 + $0x30] sm:$0xf]
        %v379 = vld [vmem:[%s3 + $0x34] sm:$0xf]
        %v380 = vld [vmem:[%s3 + $0x38] sm:$0xf]
        %v381 = vld [vmem:[%s3 + $0x3c] sm:$0xf]
        %v382 = vld [vmem:[%s6] sm:$0x1]
        %v384 = vlaneseq
        %v385 = vshrl.u32 %v384, 7
        %v386 = vsub.s32 0, %v385
        %v387 = vrot.slane %v382, %v386
        %v405 = vunpack.c.l.b16 %v366
        %v406 = vunpack.c.l.b16 %v367
        %v407 = vunpack.c.l.b16 %v368
        %v408 = vunpack.c.l.b16 %v369
        %v409 = vunpack.c.l.b16 %v370
        %v410 = vunpack.c.l.b16 %v371
        %v411 = vunpack.c.l.b16 %v372
        %v412 = vunpack.c.l.b16 %v373
        %v413 = vunpack.c.l.b16 %v374
        %v414 = vunpack.c.l.b16 %v375
        %v415 = vunpack.c.l.b16 %v376
        %v416 = vunpack.c.l.b16 %v377
        %v417 = vunpack.c.l.b16 %v378
        %v418 = vunpack.c.l.b16 %v379
        %v419 = vunpack.c.l.b16 %v380
        %v420 = vunpack.c.l.b16 %v381
        %v421 = vpack.c.b16 %v406, %v405
        %v422 = vpack.c.b16 %v408, %v407
        %v423 = vpack.c.b16 %v410, %v409
        %v424 = vpack.c.b16 %v412, %v411
        %v425 = vpack.c.b16 %v414, %v413
        %v426 = vpack.c.b16 %v416, %v415
        %v427 = vpack.c.b16 %v418, %v417
        %v428 = vpack.c.b16 %v420, %v419
        %437 = vmatprep.subr.bf16.mxu0 0
        %438 = vmatpush1.bf16.msra.mxu0 %v421
        %439 = vmatprep.subr.bf16.mxu0 0
        %440 = vmatpush1.bf16.msra.mxu0 %v422
        %441 = vmatprep.subr.bf16.mxu0 0
        %442 = vmatpush1.bf16.msra.mxu0 %v423
        %443 = vmatprep.subr.bf16.mxu0 0
        %444 = vmatpush1.bf16.msra.mxu0 %v424
        %445 = vmatprep.subr.bf16.mxu0 0
        %446 = vmatpush1.bf16.msra.mxu0 %v425
        %447 = vmatprep.subr.bf16.mxu0 0
        %448 = vmatpush1.bf16.msra.mxu0 %v426
        %449 = vmatprep.subr.bf16.mxu0 0
        %450 = vmatpush1.bf16.msra.mxu0 %v427
        %451 = vmatprep.subr.bf16.mxu0 0
        %452 = vmatpush1.bf16.msra.mxu0 %v428
        %453 = vmatprep.subr.bf16.mxu0 0
        %454 = vmatpush1.bf16.msra.mxu0 0
        %455 = vmatprep.subr.bf16.mxu0 0
        %456 = vmatpush1.bf16.msra.mxu0 0
        %457 = vmatprep.subr.bf16.mxu0 0
        %458 = vmatpush1.bf16.msra.mxu0 0
        %459 = vmatprep.subr.bf16.mxu0 0
        %460 = vmatpush1.bf16.msra.mxu0 0
        %461 = vmatprep.subr.bf16.mxu0 0
        %462 = vmatpush1.bf16.msra.mxu0 0
        %463 = vmatprep.subr.bf16.mxu0 0
        %464 = vmatpush1.bf16.msra.mxu0 0
        %465 = vmatprep.subr.bf16.mxu0 0
        %466 = vmatpush1.bf16.msra.mxu0 0
        %467 = vmatprep.subr.bf16.mxu0 0
        %468 = vmatpush1.bf16.msra.mxu0 0
        %469 = vmatprep.mubr.bf16.mxu0 0
        %470 = vmatmul.mubr.bf16.gmra.mrb[0].mxu0 %v363
        %v471 = vpop.f32.mrb[0].mxu0
        %v472 = vadd.f32 %v387, %v471
        %v473 = vpop.f32.mrb[0].mxu0
        %v474 = vpop.f32.mrb[0].mxu0
        %v475 = vpop.f32.mrb[0].mxu0
        %476 = vdwg.mxu0
        %v477 = vld [vmem:[%s4] sm:$0xf]
        %v478 = vld [vmem:[%s4 + $0x4] sm:$0xf]
        %v479 = vld [vmem:[%s4 + $0x8] sm:$0xf]
        %v480 = vld [vmem:[%s4 + $0xc] sm:$0xf]
        %v481 = vld [vmem:[%s4 + $0x10] sm:$0xf]
        %v482 = vld [vmem:[%s4 + $0x14] sm:$0xf]
        %v483 = vld [vmem:[%s4 + $0x18] sm:$0xf]
        %v484 = vld [vmem:[%s4 + $0x1c] sm:$0xf]
        %v485 = vld [vmem:[%s4 + $0x20] sm:$0xf]
        %v486 = vld [vmem:[%s4 + $0x24] sm:$0xf]
        %v487 = vld [vmem:[%s4 + $0x28] sm:$0xf]
        %v488 = vld [vmem:[%s4 + $0x2c] sm:$0xf]
        %v489 = vld [vmem:[%s4 + $0x30] sm:$0xf]
        %v490 = vld [vmem:[%s4 + $0x34] sm:$0xf]
        %v491 = vld [vmem:[%s4 + $0x38] sm:$0xf]
        %v492 = vld [vmem:[%s4 + $0x3c] sm:$0xf]
        %v493 = vld [vmem:[%s7] sm:$0x1]
        %v495 = vlaneseq
        %v496 = vshrl.u32 %v495, 7
        %v497 = vsub.s32 0, %v496
        %v498 = vrot.slane %v493, %v497
        %v516 = vunpack.c.l.b16 %v477
        %v517 = vunpack.c.l.b16 %v478
        %v518 = vunpack.c.l.b16 %v479
        %v519 = vunpack.c.l.b16 %v480
        %v520 = vunpack.c.l.b16 %v481
        %v521 = vunpack.c.l.b16 %v482
        %v522 = vunpack.c.l.b16 %v483
        %v523 = vunpack.c.l.b16 %v484
        %v524 = vunpack.c.l.b16 %v485
        %v525 = vunpack.c.l.b16 %v486
        %v526 = vunpack.c.l.b16 %v487
        %v527 = vunpack.c.l.b16 %v488
        %v528 = vunpack.c.l.b16 %v489
        %v529 = vunpack.c.l.b16 %v490
        %v530 = vunpack.c.l.b16 %v491
        %v531 = vunpack.c.l.b16 %v492
        %v532 = vpack.c.b16 %v517, %v516
        %v533 = vpack.c.b16 %v519, %v518
        %v534 = vpack.c.b16 %v521, %v520
        %v535 = vpack.c.b16 %v523, %v522
        %v536 = vpack.c.b16 %v525, %v524
        %v537 = vpack.c.b16 %v527, %v526
        %v538 = vpack.c.b16 %v529, %v528
        %v539 = vpack.c.b16 %v531, %v530
        %548 = vmatprep.subr.bf16.mxu0 0
        %549 = vmatpush1.bf16.msra.mxu0 %v532
        %550 = vmatprep.subr.bf16.mxu0 0
        %551 = vmatpush1.bf16.msra.mxu0 %v533
        %552 = vmatprep.subr.bf16.mxu0 0
        %553 = vmatpush1.bf16.msra.mxu0 %v534
        %554 = vmatprep.subr.bf16.mxu0 0
        %555 = vmatpush1.bf16.msra.mxu0 %v535
        %556 = vmatprep.subr.bf16.mxu0 0
        %557 = vmatpush1.bf16.msra.mxu0 %v536
        %558 = vmatprep.subr.bf16.mxu0 0
        %559 = vmatpush1.bf16.msra.mxu0 %v537
        %560 = vmatprep.subr.bf16.mxu0 0
        %561 = vmatpush1.bf16.msra.mxu0 %v538
        %562 = vmatprep.subr.bf16.mxu0 0
        %563 = vmatpush1.bf16.msra.mxu0 %v539
        %564 = vmatprep.subr.bf16.mxu0 0
        %565 = vmatpush1.bf16.msra.mxu0 0
        %566 = vmatprep.subr.bf16.mxu0 0
        %567 = vmatpush1.bf16.msra.mxu0 0
        %568 = vmatprep.subr.bf16.mxu0 0
        %569 = vmatpush1.bf16.msra.mxu0 0
        %570 = vmatprep.subr.bf16.mxu0 0
        %571 = vmatpush1.bf16.msra.mxu0 0
        %572 = vmatprep.subr.bf16.mxu0 0
        %573 = vmatpush1.bf16.msra.mxu0 0
        %574 = vmatprep.subr.bf16.mxu0 0
        %575 = vmatpush1.bf16.msra.mxu0 0
        %576 = vmatprep.subr.bf16.mxu0 0
        %577 = vmatpush1.bf16.msra.mxu0 0
        %578 = vmatprep.subr.bf16.mxu0 0
        %579 = vmatpush1.bf16.msra.mxu0 0
        %580 = vmatprep.mubr.bf16.mxu0 0
        %581 = vmatmul.mubr.bf16.gmra.mrb[0].mxu0 %v364
        %v582 = vpop.f32.mrb[0].mxu0
        %v583 = vadd.f32 %v498, %v582
        %v584 = vpop.f32.mrb[0].mxu0
        %v585 = vpop.f32.mrb[0].mxu0
        %v586 = vpop.f32.mrb[0].mxu0
        %587 = vdwg.mxu0
        %v588 = vld [vmem:[%s5] sm:$0xf]
        %v589 = vld [vmem:[%s5 + $0x4] sm:$0xf]
        %v590 = vld [vmem:[%s5 + $0x8] sm:$0xf]
        %v591 = vld [vmem:[%s5 + $0xc] sm:$0xf]
        %v592 = vld [vmem:[%s5 + $0x10] sm:$0xf]
        %v593 = vld [vmem:[%s5 + $0x14] sm:$0xf]
        %v594 = vld [vmem:[%s5 + $0x18] sm:$0xf]
        %v595 = vld [vmem:[%s5 + $0x1c] sm:$0xf]
        %v596 = vld [vmem:[%s5 + $0x20] sm:$0xf]
        %v597 = vld [vmem:[%s5 + $0x24] sm:$0xf]
        %v598 = vld [vmem:[%s5 + $0x28] sm:$0xf]
        %v599 = vld [vmem:[%s5 + $0x2c] sm:$0xf]
        %v600 = vld [vmem:[%s5 + $0x30] sm:$0xf]
        %v601 = vld [vmem:[%s5 + $0x34] sm:$0xf]
        %v602 = vld [vmem:[%s5 + $0x38] sm:$0xf]
        %v603 = vld [vmem:[%s5 + $0x3c] sm:$0xf]
        %v604 = vld [vmem:[%s8] sm:$0x1]
        %v606 = vlaneseq
        %v607 = vshrl.u32 %v606, 7
        %v608 = vsub.s32 0, %v607
        %v609 = vrot.slane %v604, %v608
        %v627 = vunpack.c.l.b16 %v588
        %v628 = vunpack.c.l.b16 %v589
        %v629 = vunpack.c.l.b16 %v590
        %v630 = vunpack.c.l.b16 %v591
        %v631 = vunpack.c.l.b16 %v592
        %v632 = vunpack.c.l.b16 %v593
        %v633 = vunpack.c.l.b16 %v594
        %v634 = vunpack.c.l.b16 %v595
        %v635 = vunpack.c.l.b16 %v596
        %v636 = vunpack.c.l.b16 %v597
        %v637 = vunpack.c.l.b16 %v598
        %v638 = vunpack.c.l.b16 %v599
        %v639 = vunpack.c.l.b16 %v600
        %v640 = vunpack.c.l.b16 %v601
        %v641 = vunpack.c.l.b16 %v602
        %v642 = vunpack.c.l.b16 %v603
        %v643 = vpack.c.b16 %v628, %v627
        %v644 = vpack.c.b16 %v630, %v629
        %v645 = vpack.c.b16 %v632, %v631
        %v646 = vpack.c.b16 %v634, %v633
        %v647 = vpack.c.b16 %v636, %v635
        %v648 = vpack.c.b16 %v638, %v637
        %v649 = vpack.c.b16 %v640, %v639
        %v650 = vpack.c.b16 %v642, %v641
        %659 = vmatprep.subr.bf16.mxu0 0
        %660 = vmatpush1.bf16.msra.mxu0 %v643
        %661 = vmatprep.subr.bf16.mxu0 0
        %662 = vmatpush1.bf16.msra.mxu0 %v644
        %663 = vmatprep.subr.bf16.mxu0 0
        %664 = vmatpush1.bf16.msra.mxu0 %v645
        %665 = vmatprep.subr.bf16.mxu0 0
        %666 = vmatpush1.bf16.msra.mxu0 %v646
        %667 = vmatprep.subr.bf16.mxu0 0
        %668 = vmatpush1.bf16.msra.mxu0 %v647
        %669 = vmatprep.subr.bf16.mxu0 0
        %670 = vmatpush1.bf16.msra.mxu0 %v648
        %671 = vmatprep.subr.bf16.mxu0 0
        %672 = vmatpush1.bf16.msra.mxu0 %v649
        %673 = vmatprep.subr.bf16.mxu0 0
        %674 = vmatpush1.bf16.msra.mxu0 %v650
        %675 = vmatprep.subr.bf16.mxu0 0
        %676 = vmatpush1.bf16.msra.mxu0 0
        %677 = vmatprep.subr.bf16.mxu0 0
        %678 = vmatpush1.bf16.msra.mxu0 0
        %679 = vmatprep.subr.bf16.mxu0 0
        %680 = vmatpush1.bf16.msra.mxu0 0
        %681 = vmatprep.subr.bf16.mxu0 0
        %682 = vmatpush1.bf16.msra.mxu0 0
        %683 = vmatprep.subr.bf16.mxu0 0
        %684 = vmatpush1.bf16.msra.mxu0 0
        %685 = vmatprep.subr.bf16.mxu0 0
        %686 = vmatpush1.bf16.msra.mxu0 0
        %687 = vmatprep.subr.bf16.mxu0 0
        %688 = vmatpush1.bf16.msra.mxu0 0
        %689 = vmatprep.subr.bf16.mxu0 0
        %690 = vmatpush1.bf16.msra.mxu0 0
        %691 = vmatprep.mubr.bf16.mxu0 0
        %692 = vmatmul.mubr.bf16.gmra.mrb[0].mxu0 %v365
        %v693 = vpop.f32.mrb[0].mxu0
        %v694 = vadd.f32 %v609, %v693
        %v695 = vpop.f32.mrb[0].mxu0
        %v696 = vpop.f32.mrb[0].mxu0
        %v697 = vpop.f32.mrb[0].mxu0
        %698 = vdwg.mxu0
        %v699 = vmul.f32 %v583, 0.17677669
        %v700 = vpack.c.bf16 %v699, %v699
        %v701 = vpack.c.bf16 %v472, %v472
        %vm702 = vcmask 261120
        %v704 = vsel %vm702, %v700, 0
        %v707 = vsel %vm702, %v701, 0
        %709 = vmatprep.subr.bf16.mxu0 0
        %710 = vmatpush1.bf16.xpose.msra.mxu0 %v707
        %711 = vmatprep.subr.bf16.mxu0 0
        %712 = vmatpush1.bf16.xpose.msra.mxu0 0
        %713 = vmatprep.subr.bf16.mxu0 0
        %714 = vmatpush1.bf16.xpose.msra.mxu0 0
        %715 = vmatprep.subr.bf16.mxu0 0
        %716 = vmatpush1.bf16.xpose.msra.mxu0 0
        %717 = vmatprep.subr.bf16.mxu0 0
        %718 = vmatpush1.bf16.xpose.msra.mxu0 0
        %719 = vmatprep.subr.bf16.mxu0 0
        %720 = vmatpush1.bf16.xpose.msra.mxu0 0
        %721 = vmatprep.subr.bf16.mxu0 0
        %722 = vmatpush1.bf16.xpose.msra.mxu0 0
        %723 = vmatprep.subr.bf16.mxu0 0
        %724 = vmatpush1.bf16.xpose.msra.mxu0 0
        %725 = vmatprep.subr.bf16.mxu0 0
        %726 = vmatpush1.bf16.xpose.msra.mxu0 0
        %727 = vmatprep.subr.bf16.mxu0 0
        %728 = vmatpush1.bf16.xpose.msra.mxu0 0
        %729 = vmatprep.subr.bf16.mxu0 0
        %730 = vmatpush1.bf16.xpose.msra.mxu0 0
        %731 = vmatprep.subr.bf16.mxu0 0
        %732 = vmatpush1.bf16.xpose.msra.mxu0 0
        %733 = vmatprep.subr.bf16.mxu0 0
        %734 = vmatpush1.bf16.xpose.msra.mxu0 0
        %735 = vmatprep.subr.bf16.mxu0 0
        %736 = vmatpush1.bf16.xpose.msra.mxu0 0
        %737 = vmatprep.subr.bf16.mxu0 0
        %738 = vmatpush1.bf16.xpose.msra.mxu0 0
        %739 = vmatprep.subr.bf16.mxu0 0
        %740 = vmatpush1.bf16.xpose.msra.mxu0 0
        %741 = vmatprep.mubr.bf16.mxu0 0
        %742 = vmatmul.mubr.bf16.gmra.mrb[0].mxu0 %v704
        %v743 = vpop.f32.mrb[0].mxu0
        %v744 = vadd.f32 0.0, %v743
        %v745 = vpop.f32.mrb[0].mxu0
        %v746 = vpop.f32.mrb[0].mxu0
        %v747 = vpop.f32.mrb[0].mxu0
        %748 = vdwg.mxu0
        %vm749 = vcmask 64512
        %v750 = vsel %vm749, %v744, -inf
        %751 = vmax.xlane.f32.xlu0 %v750
        %v752 = vpop.xlane.xlu0 %751
        %v753 = vsub.f32 %v744, %v752
        %v754 = vmul.f32 %v753, 1.442695
        %v755 = vpow.pop %v754
        %v756 = vsel %vm749, %v755, 0.0
        %757 = vadd.xlane.f32.xlu0 %v756
        %v758 = vpop.xlane.xlu0 %757
        %v759 = vrcp.pop %v758
        %v760 = vmul.f32 %v755, %v759
        %v761 = vpack.c.bf16 %v760, %v760
        %v762 = vpack.c.bf16 %v694, %v694
        %v764 = vsel %vm749, %v761, 0
        %vm766 = vcmask 1043456
        %v768 = vsel %vm766, %v762, 0
        %770 = vmatprep.subr.bf16.mxu0 0
        %771 = vmatpush1.bf16.msra.mxu0 %v768
        %772 = vmatprep.subr.bf16.mxu0 0
        %773 = vmatpush1.bf16.msra.mxu0 0
        %774 = vmatprep.subr.bf16.mxu0 0
        %775 = vmatpush1.bf16.msra.mxu0 0
        %776 = vmatprep.subr.bf16.mxu0 0
        %777 = vmatpush1.bf16.msra.mxu0 0
        %778 = vmatprep.subr.bf16.mxu0 0
        %779 = vmatpush1.bf16.msra.mxu0 0
        %780 = vmatprep.subr.bf16.mxu0 0
        %781 = vmatpush1.bf16.msra.mxu0 0
        %782 = vmatprep.subr.bf16.mxu0 0
        %783 = vmatpush1.bf16.msra.mxu0 0
        %784 = vmatprep.subr.bf16.mxu0 0
        %785 = vmatpush1.bf16.msra.mxu0 0
        %786 = vmatprep.subr.bf16.mxu0 0
        %787 = vmatpush1.bf16.msra.mxu0 0
        %788 = vmatprep.subr.bf16.mxu0 0
        %789 = vmatpush1.bf16.msra.mxu0 0
        %790 = vmatprep.subr.bf16.mxu0 0
        %791 = vmatpush1.bf16.msra.mxu0 0
        %792 = vmatprep.subr.bf16.mxu0 0
        %793 = vmatpush1.bf16.msra.mxu0 0
        %794 = vmatprep.subr.bf16.mxu0 0
        %795 = vmatpush1.bf16.msra.mxu0 0
        %796 = vmatprep.subr.bf16.mxu0 0
        %797 = vmatpush1.bf16.msra.mxu0 0
        %798 = vmatprep.subr.bf16.mxu0 0
        %799 = vmatpush1.bf16.msra.mxu0 0
        %800 = vmatprep.subr.bf16.mxu0 0
        %801 = vmatpush1.bf16.msra.mxu0 0
        %802 = vmatprep.mubr.bf16.mxu0 0
        %803 = vmatmul.mubr.bf16.gmra.mrb[0].mxu0 %v764
        %v804 = vpop.f32.mrb[0].mxu0
        %v805 = vadd.f32 0.0, %v804
        %v806 = vpop.f32.mrb[0].mxu0
        %v807 = vpop.f32.mrb[0].mxu0
        %v808 = vpop.f32.mrb[0].mxu0
        %809 = vdwg.mxu0
        %810 = vst.msk [vmem:[%s349] sm:$0xff] %vm702, %v805
        %s811 = sand.u32 %s235, 1
        %s812 = scalar_lea.sflag [#allocation3], %s811
        %s813 = sand.u32 %s235, 1
        %s814 = smul.addr %s813, 8
        %s815 = scalar_lea.vmem [#allocation2], %s814
        // Predicated region
        $region57: #{tpu_custom_call.1} parent=55 // pred_check
          %p816 = pneg %p245
        $region58: #{tpu_custom_call.1} parent=55 // pred_check_branch
          %818 = sbr.rel (%p816) target = $region60
        $region59: #{tpu_custom_call.1} parent=55 // pred_region
          %s820 = ssub.s32 128, 128
          %821 = vsyncadd %s812, %s820
          %s822 = smul.addr %s23, 128
          %s823 = scalar_lea.hbm %s9, %s822
          %s825 = sshll.u32 %s815, 4
          %s826 = int_to_ptr.vmem [resolvable:$true] %s825
          %828 = dma.vmem_to_hbm [thread:$0]  %s826, 128, %s823, %s812
        $region60: #{tpu_custom_call.1} parent=55 // pred_fallthru
          _
      $region56: #{tpu_custom_call.1} parent=5 // pred_fallthru
        _
      %p829 = scmp.le.s32.totalorder 2, %s18
      // Predicated region
      $region61: #{tpu_custom_call.1} parent=5 // pred_check
        %p830 = pneg %p829
      $region62: #{tpu_custom_call.1} parent=5 // pred_check_branch
        %832 = sbr.rel (%p830) target = $region64
      $region63: #{tpu_custom_call.1} parent=5 // pred_region
        %s833 = ssub.s32 %s18, 2
        // Predicated region
        $region65: #{tpu_custom_call.1} parent=63 // pred_check
          %p834 = pneg %p251
        $region66: #{tpu_custom_call.1} parent=63 // pred_check_branch
          %836 = sbr.rel (%p834) target = $region68
        $region67: #{tpu_custom_call.1} parent=63 // pred_region
          %s837 = sand.u32 %s236, 1
          %s838 = scalar_lea.sflag [#allocation3], %s837
          %s839 = sand.u32 %s236, 1
          %s840 = smul.addr %s839, 8
          %s841 = scalar_lea.vmem [#allocation2], %s840
          %842 = dma.done %s838, 128
        $region68: #{tpu_custom_call.1} parent=63 // pred_fallthru
          _
      $region64: #{tpu_custom_call.1} parent=5 // pred_fallthru
        _
    $region6: #{tpu_custom_call.1} parent=1 // loop_footer
      %s22 = sadd.s32 1, %s18
    $region7: #{tpu_custom_call.1} parent=1 // loop_footer_branch
      %17 = sbr.rel target = $region3
    $region8: #{tpu_custom_call.1} parent=1 // loop_exit
      _
    %843 = vsyncpa [#allocation3], 1
    %s844 = scalar_lea.sflag [#allocation3], 1
    %845 = vsyncpa %s844, 1

</llo_original>
